<compile_context>
chip_gen: v6e
topology: v6e:2x2x1
jax: 0.10.0
libtpu: 0.0.40
codegen_flags: <defaults>
</compile_context>

<pallas_src>
import numpy as np
import jax
import jax.numpy as jnp
from jax.experimental import pallas as pl
from jax.experimental.pallas import tpu as pltpu


def _sap_kernel(x_ref, wqk_ref, bqk_ref, watt_ref, batt_ref, out_ref):
    Bt, S, H = x_ref.shape
    H2 = wqk_ref.shape[1] // 2

    x = x_ref[...]                                             # [Bt, S, H], native dtype

    # ---- fused q/k projection: batch folded into M, single MXU matmul ----
    x2d = x.reshape(Bt * S, H)
    qk = jnp.dot(x2d, wqk_ref[...],
                 preferred_element_type=jnp.float32)           # [Bt*S, 2*H2] f32 acc
    qk = qk + bqk_ref[...]                                     # bias in f32
    qk = qk.reshape(Bt, S, 2 * H2)
    q = qk[:, :, :H2].astype(x.dtype)                          # back to MXU-native dtype
    k = qk[:, :, H2:].astype(x.dtype)

    # ---- scores = q @ k^T per batch element (batched MXU dot) ----
    scores = jnp.einsum('bqd,bkd->bqk', q, k,
                        preferred_element_type=jnp.float32)    # [Bt, S, S] f32

    # ---- fused key-axis softmax + att matvec (no normalized S x S tensor) ----
    m = jnp.max(scores, axis=-1, keepdims=True)                # [Bt, S, 1]
    p = jnp.exp(scores - m)                                    # [Bt, S, S]
    l = jnp.sum(p, axis=-1, keepdims=True)                     # [Bt, S, 1]
    u = jnp.sum(p * watt_ref[...], axis=-1, keepdims=True)     # [Bt, S, 1]
    att = u / l + batt_ref[...]                                # [Bt, S, 1]

    # ---- softmax over the sequence axis (dim=1 in the reference) ----
    m2 = jnp.max(att, axis=1, keepdims=True)
    w = jnp.exp(att - m2)
    w = w / jnp.sum(w, axis=1, keepdims=True)                  # [Bt, S, 1]

    # ---- weighted pooling over S as a batched MXU matvec ----
    pooled = jnp.einsum('bsk,bsh->bkh', w.astype(x.dtype), x,
                        preferred_element_type=jnp.float32)    # [Bt, 1, H]
    out_ref[...] = pooled[:, 0, :].astype(out_ref.dtype)


def prepare_sap_params(wq, bq, wk, bk, watt, batt, compute_dtype=jnp.float32):
    """One-time weight preprocessing (hoisted out of the per-call path).

    PyTorch layouts:
      wq, wk : [H//2, H]   (nn.Linear.weight, [out, in])
      bq, bk : [H//2]
      watt   : [1, S]      (att = nn.Linear(seq_len, 1))
      batt   : [1]
    """
    H2 = wq.shape[0]
    S = watt.shape[-1]
    wqk = jnp.concatenate([jnp.transpose(wq), jnp.transpose(wk)],
                          axis=1).astype(compute_dtype)        # [H, 2*H2]
    bqk = jnp.concatenate([bq, bk]).reshape(1, 2 * H2).astype(jnp.float32)
    watt_r = watt.reshape(1, S).astype(jnp.float32)
    batt_r = batt.reshape(1, 1).astype(jnp.float32)
    return wqk, bqk, watt_r, batt_r


def _pick_block_b(B, max_bt=8):
    for bt in range(min(B, max_bt), 0, -1):
        if B % bt == 0:
            return bt
    return 1


def self_attention_pooling(x, wqk, bqk, watt, batt):
    """x: [B, S, H]; wqk/bqk/watt/batt from prepare_sap_params. Returns [B, H] f32."""
    B, S, H = x.shape
    H2x2 = wqk.shape[1]
    Bt = _pick_block_b(B)

    flops = B * (2 * S * H * H2x2          # fused q/k projection
                 + S * S * H2x2            # q @ k^T
                 + 4 * S * S               # exp-arg / l / u passes
                 + 2 * S * H)              # pooling matvec
    transcendentals = B * (S * S + S)      # exp for both softmaxes
    bytes_accessed = int(x.size) * x.dtype.itemsize + B * H * 4 \
        + int(wqk.size) * wqk.dtype.itemsize + (H2x2 + S + 1) * 4

    return pl.pallas_call(
        _sap_kernel,
        out_shape=jax.ShapeDtypeStruct((B, H), jnp.float32),
        grid_spec=pltpu.PrefetchScalarGridSpec(
            num_scalar_prefetch=0,
            grid=(B // Bt,),
            in_specs=[
                pl.BlockSpec((Bt, S, H), lambda b: (b, 0, 0)),   # x (Bt rows / step)
                pl.BlockSpec((H, H2x2), lambda b: (0, 0)),       # [Wq^T | Wk^T]
                pl.BlockSpec((1, H2x2), lambda b: (0, 0)),       # [bq | bk]
                pl.BlockSpec((1, S), lambda b: (0, 0)),          # att weight
                pl.BlockSpec((1, 1), lambda b: (0, 0)),          # att bias
            ],
            out_specs=pl.BlockSpec((Bt, H), lambda b: (b, 0)),
        ),
        compiler_params=pltpu.CompilerParams(
            dimension_semantics=("parallel",),
            vmem_limit_bytes=64 * 1024 * 1024),
        cost_estimate=pl.CostEstimate(flops=flops,
                                      transcendentals=transcendentals,
                                      bytes_accessed=bytes_accessed),
    )(x, wqk, bqk, watt, batt)
    # TODO(synk): for very large S (>= ~2-3k) switch to a key-tiled flash-style
    # pass so the f32 [S, S] block is never resident (matters on v7x's 64 MiB VMEM).


# ---------------- pure NumPy reference (mirrors the PyTorch forward) ----------
def _softmax_np(x, axis):
    m = x.max(axis=axis, keepdims=True)
    e = np.exp(x - m)
    return e / e.sum(axis=axis, keepdims=True)


def self_attention_pooling_reference(x, wq, bq, wk, bk, watt, batt):
    x = np.asarray(x, dtype=np.float64)
    wq = np.asarray(wq, dtype=np.float64)
    wk = np.asarray(wk, dtype=np.float64)
    bq = np.asarray(bq, dtype=np.float64)
    bk = np.asarray(bk, dtype=np.float64)
    watt = np.asarray(watt, dtype=np.float64)
    batt = np.asarray(batt, dtype=np.float64)

    q = x @ wq.T + bq                                   # [B, S, H2]
    k = x @ wk.T + bk                                   # [B, S, H2]
    s = q @ np.transpose(k, (0, 2, 1))                  # [B, S, S]
    s = _softmax_np(s, axis=-1)
    a = s @ watt.T + batt                               # [B, S, 1]
    a = _softmax_np(a, axis=1)
    return np.sum(a * x, axis=1)                        # [B, H]


if __name__ == "__main__":
    key = jax.random.PRNGKey(0)
    B, S, H = 2, 8, 32
    H2 = H // 2

    ks = jax.random.split(key, 7)
    x = jax.random.normal(ks[0], (B, S, H), dtype=jnp.float32)

    scale_h = 1.0 / np.sqrt(H)
    wq = jax.random.uniform(ks[1], (H2, H), minval=-scale_h, maxval=scale_h,
                            dtype=jnp.float32)
    bq = jax.random.uniform(ks[2], (H2,), minval=-scale_h, maxval=scale_h,
                            dtype=jnp.float32)
    wk = jax.random.uniform(ks[3], (H2, H), minval=-scale_h, maxval=scale_h,
                            dtype=jnp.float32)
    bk = jax.random.uniform(ks[4], (H2,), minval=-scale_h, maxval=scale_h,
                            dtype=jnp.float32)
    scale_s = 1.0 / np.sqrt(S)
    watt = jax.random.uniform(ks[5], (1, S), minval=-scale_s, maxval=scale_s,
                              dtype=jnp.float32)
    batt = jax.random.uniform(ks[6], (1,), minval=-scale_s, maxval=scale_s,
                              dtype=jnp.float32)

    # One-time weight fusion (hoisted out of the hot path).
    wqk, bqk, watt_r, batt_r = prepare_sap_params(wq, bq, wk, bk, watt, batt,
                                                  compute_dtype=x.dtype)

    out = self_attention_pooling(x, wqk, bqk, watt_r, batt_r)
    out = jax.block_until_ready(out)

    ref = self_attention_pooling_reference(np.asarray(x), np.asarray(wq),
                                           np.asarray(bq), np.asarray(wk),
                                           np.asarray(bk), np.asarray(watt),
                                           np.asarray(batt))
    np.testing.assert_allclose(np.asarray(out), ref, rtol=5e-4, atol=1e-5)
    print("KERNEL_OK")
</pallas_src>

<mosaic_0001>
module attributes {stable_mosaic.version = 11 : i64} {
  func.func @_sap_kernel(%arg0: i32, %arg1: memref<2x8x32xf32, #tpu.memory_space<vmem>>, %arg2: memref<32x32xf32, #tpu.memory_space<vmem>>, %arg3: memref<1x32xf32, #tpu.memory_space<vmem>>, %arg4: memref<1x8xf32, #tpu.memory_space<vmem>>, %arg5: memref<1x1xf32, #tpu.memory_space<vmem>>, %arg6: memref<2x32xf32, #tpu.memory_space<vmem>>) attributes {dimension_semantics = [#tpu.dimension_semantics<parallel>], iteration_bounds = array<i64: 1>, scalar_prefetch = 0 : i64, scratch_operands = 0 : i64, tpu.core_type = #tpu.core_type<tc>, window_params = [{transform_indices = @transform_0, window_bounds = array<i64: 2, 8, 32>}, {pipeline_mode = #tpu.pipeline_mode<synchronous>, transform_indices = @transform_1, window_bounds = array<i64: 32, 32>}, {pipeline_mode = #tpu.pipeline_mode<synchronous>, transform_indices = @transform_2, window_bounds = array<i64: 1, 32>}, {pipeline_mode = #tpu.pipeline_mode<synchronous>, transform_indices = @transform_3, window_bounds = array<i64: 1, 8>}, {pipeline_mode = #tpu.pipeline_mode<synchronous>, transform_indices = @transform_4, window_bounds = array<i64: 1, 1>}, {transform_indices = @transform_5, window_bounds = array<i64: 2, 32>}]} {
    %c0 = arith.constant 0 : index
    %c0_0 = arith.constant 0 : index
    %c0_1 = arith.constant 0 : index
    %0 = vector.load %arg1[%c0, %c0_0, %c0_1] : memref<2x8x32xf32, #tpu.memory_space<vmem>>, vector<2x8x32xf32>
    %1 = vector.shape_cast %0 : vector<2x8x32xf32> to vector<16x32xf32>
    %c0_2 = arith.constant 0 : index
    %c0_3 = arith.constant 0 : index
    %2 = vector.load %arg2[%c0_2, %c0_3] : memref<32x32xf32, #tpu.memory_space<vmem>>, vector<32x32xf32>
    %cst = arith.constant dense<0.000000e+00> : vector<16x32xf32>
    %3 = tpu.matmul %1, %2, %cst {dimension_numbers = #tpu.dot_dimension_numbers<[1], [0], [0], [1], [0, 0, 1, 1], [], []>} : vector<16x32xf32>, vector<32x32xf32>, vector<16x32xf32> -> vector<16x32xf32>
    %c0_4 = arith.constant 0 : index
    %c0_5 = arith.constant 0 : index
    %4 = vector.load %arg3[%c0_4, %c0_5] : memref<1x32xf32, #tpu.memory_space<vmem>>, vector<1x32xf32>
    %5 = vector.broadcast %4 : vector<1x32xf32> to vector<16x32xf32>
    %6 = arith.addf %3, %5 : vector<16x32xf32>
    %7 = vector.shape_cast %6 : vector<16x32xf32> to vector<2x8x32xf32>
    %8 = vector.extract_strided_slice %7 {offsets = [0, 0, 0], sizes = [2, 8, 16], strides = [1, 1, 1]} : vector<2x8x32xf32> to vector<2x8x16xf32>
    %9 = vector.extract_strided_slice %7 {offsets = [0, 0, 16], sizes = [2, 8, 16], strides = [1, 1, 1]} : vector<2x8x32xf32> to vector<2x8x16xf32>
    "tpu.trace_start"() <{level = 10 : i32, message = "bqd,bkd->bqk"}> : () -> ()
    %cst_6 = arith.constant dense<0.000000e+00> : vector<2x8x8xf32>
    %10 = tpu.matmul %8, %9, %cst_6 {dimension_numbers = #tpu.dot_dimension_numbers<[2], [2], [1], [1], [0, 0, 0, 1, 1, 1], [0], [0]>} : vector<2x8x16xf32>, vector<2x8x16xf32>, vector<2x8x8xf32> -> vector<2x8x8xf32>
    "tpu.trace_stop"() : () -> ()
    %cst_7 = arith.constant dense<0xFF800000> : vector<2x8xf32>
    %11 = vector.multi_reduction <maximumf>, %10, %cst_7 [2] : vector<2x8x8xf32> to vector<2x8xf32>
    %12 = vector.shape_cast %11 : vector<2x8xf32> to vector<2x8x1xf32>
    %13 = vector.broadcast %12 : vector<2x8x1xf32> to vector<2x8x8xf32>
    %14 = arith.subf %10, %13 : vector<2x8x8xf32>
    %15 = math.exp %14 : vector<2x8x8xf32>
    %cst_8 = arith.constant dense<0.000000e+00> : vector<2x8xf32>
    %16 = vector.multi_reduction <add>, %15, %cst_8 [2] : vector<2x8x8xf32> to vector<2x8xf32>
    %17 = vector.shape_cast %16 : vector<2x8xf32> to vector<2x8x1xf32>
    %c0_9 = arith.constant 0 : index
    %c0_10 = arith.constant 0 : index
    %18 = vector.load %arg4[%c0_9, %c0_10] : memref<1x8xf32, #tpu.memory_space<vmem>>, vector<1x8xf32>
    %19 = vector.shape_cast %18 : vector<1x8xf32> to vector<1x1x8xf32>
    %20 = vector.broadcast %19 : vector<1x1x8xf32> to vector<2x8x8xf32>
    %21 = arith.mulf %15, %20 : vector<2x8x8xf32>
    %cst_11 = arith.constant dense<0.000000e+00> : vector<2x8xf32>
    %22 = vector.multi_reduction <add>, %21, %cst_11 [2] : vector<2x8x8xf32> to vector<2x8xf32>
    %23 = vector.shape_cast %22 : vector<2x8xf32> to vector<2x8x1xf32>
    %24 = arith.divf %23, %17 : vector<2x8x1xf32>
    %c0_12 = arith.constant 0 : index
    %c0_13 = arith.constant 0 : index
    %25 = vector.load %arg5[%c0_12, %c0_13] : memref<1x1xf32, #tpu.memory_space<vmem>>, vector<1x1xf32>
    %26 = vector.shape_cast %25 : vector<1x1xf32> to vector<1x1x1xf32>
    %27 = vector.broadcast %26 : vector<1x1x1xf32> to vector<2x8x1xf32>
    %28 = arith.addf %24, %27 : vector<2x8x1xf32>
    %cst_14 = arith.constant dense<0xFF800000> : vector<2x1xf32>
    %29 = vector.multi_reduction <maximumf>, %28, %cst_14 [1] : vector<2x8x1xf32> to vector<2x1xf32>
    %30 = vector.shape_cast %29 : vector<2x1xf32> to vector<2x1x1xf32>
    %31 = vector.broadcast %30 : vector<2x1x1xf32> to vector<2x8x1xf32>
    %32 = arith.subf %28, %31 : vector<2x8x1xf32>
    %33 = math.exp %32 : vector<2x8x1xf32>
    %cst_15 = arith.constant dense<0.000000e+00> : vector<2x1xf32>
    %34 = vector.multi_reduction <add>, %33, %cst_15 [1] : vector<2x8x1xf32> to vector<2x1xf32>
    %35 = vector.shape_cast %34 : vector<2x1xf32> to vector<2x1x1xf32>
    %36 = vector.broadcast %35 : vector<2x1x1xf32> to vector<2x8x1xf32>
    %37 = arith.divf %33, %36 : vector<2x8x1xf32>
    "tpu.trace_start"() <{level = 10 : i32, message = "bsk,bsh->bkh"}> : () -> ()
    %cst_16 = arith.constant dense<0.000000e+00> : vector<2x1x32xf32>
    %38 = tpu.matmul %37, %0, %cst_16 {dimension_numbers = #tpu.dot_dimension_numbers<[1], [1], [2], [2], [0, 0, 0, 2, 1, 2], [0], [0]>} : vector<2x8x1xf32>, vector<2x8x32xf32>, vector<2x1x32xf32> -> vector<2x1x32xf32>
    "tpu.trace_stop"() : () -> ()
    %39 = vector.shape_cast %38 : vector<2x1x32xf32> to vector<2x32xf32>
    %c0_17 = arith.constant 0 : index
    %c0_18 = arith.constant 0 : index
    %40 = vector.load %arg6[%c0_17, %c0_18] : memref<2x32xf32, #tpu.memory_space<vmem>>, vector<2x32xf32>
    tpu.vector_store %arg6[%c0_17, %c0_18], %39 {strides = array<i32>} : memref<2x32xf32, #tpu.memory_space<vmem>>, vector<2x32xf32>,
    return
  }
  func.func @transform_0(%arg0: i32) -> (i32, i32, i32) {
    %c0_i32 = arith.constant 0 : i32
    %c0_i32_0 = arith.constant 0 : i32
    %c0_i32_1 = arith.constant 0 : i32
    return %arg0, %c0_i32, %c0_i32_0 : i32, i32, i32
  }
  func.func @transform_1(%arg0: i32) -> (i32, i32) {
    %c0_i32 = arith.constant 0 : i32
    %c0_i32_0 = arith.constant 0 : i32
    %c0_i32_1 = arith.constant 0 : i32
    return %c0_i32, %c0_i32_0 : i32, i32
  }
  func.func @transform_2(%arg0: i32) -> (i32, i32) {
    %c0_i32 = arith.constant 0 : i32
    %c0_i32_0 = arith.constant 0 : i32
    %c0_i32_1 = arith.constant 0 : i32
    return %c0_i32, %c0_i32_0 : i32, i32
  }
  func.func @transform_3(%arg0: i32) -> (i32, i32) {
    %c0_i32 = arith.constant 0 : i32
    %c0_i32_0 = arith.constant 0 : i32
    %c0_i32_1 = arith.constant 0 : i32
    return %c0_i32, %c0_i32_0 : i32, i32
  }
  func.func @transform_4(%arg0: i32) -> (i32, i32) {
    %c0_i32 = arith.constant 0 : i32
    %c0_i32_0 = arith.constant 0 : i32
    %c0_i32_1 = arith.constant 0 : i32
    return %c0_i32, %c0_i32_0 : i32, i32
  }
  func.func @transform_5(%arg0: i32) -> (i32, i32) {
    %c0_i32 = arith.constant 0 : i32
    %c0_i32_0 = arith.constant 0 : i32
    return %arg0, %c0_i32 : i32, i32
  }
}

</mosaic_0001>

<llo_original>
// kernel: tpu_custom_call.1
$region0: #{tpu_custom_call.1}
  #allocation0 [shape = 'u32[]', space=smem, size = 0x4, offset = 0x4, fixed_abs, tag = 'smem constant byte address 0x4 - core index']
  #allocation1 [shape = 'u32[144,128]{1,0:T(1,128)}', space=vmem, size = 0x12000, scoped, tag = 'internal scratch']
  #allocation2 [shape = 'f32[1,1]{1,0:T(1,128)S(1)}', space=vmem, size = 0x200, scoped, tag = 'scoped memory for tpu_custom_call.1']
  %s0 = inlined_call_operand.hbm [shape: f32[2,8,32], index: 0, kind: input, shape index: {}]
  %s1 = inlined_call_operand.hbm [shape: f32[32,32], index: 1, kind: input, shape index: {}]
  %s2 = inlined_call_operand.vmem [shape: f32[1,32], index: 2, kind: input, shape index: {}]
  %s3 = inlined_call_operand.vmem [shape: f32[1,8], index: 3, kind: input, shape index: {}]
  %s4 = inlined_call_operand.<no memory space> [shape: f32[1,1], index: 4, kind: input, shape index: {}]
  %s5 = inlined_call_operand.hbm [shape: f32[2,32], index: 5, kind: output, shape index: {}]
  %s6 = sld [smem:[#allocation0]]
  $region38: #{tpu_custom_call.1} parent=0
    _
  %s8 = ssub.s32 1, %s6
  %s9 = scalar_select 0, %s8, %s6
  %v10 = vstv %s4
  %11 = vst [vmem:[#allocation2] sm:$0x1] %v10
  $region1: #{tpu_custom_call.1} parent=0
    #allocation3 [shape = 'u8[8192]{0}', space=vmem, size = 0x2000, scoped, tag = 'input window, operand 0, single buffered']
    #allocation4 [shape = 's32[1]{0}', space=sflag, size = 0x4, scoped, tag = 'scoped memory for tpu_custom_call.1']
    #allocation5 [shape = 's32[1]{0}', space=sflag, size = 0x4, scoped, tag = 'scoped memory for tpu_custom_call.1']
    #allocation6 [shape = 'u8[16384]{0}', space=vmem, size = 0x4000, scoped, tag = 'input window, operand 1, single buffered']
    #allocation7 [shape = 's32[1]{0}', space=sflag, size = 0x4, scoped, tag = 'scoped memory for tpu_custom_call.1']
    #allocation8 [shape = 'u8[1024]{0}', space=vmem, size = 0x400, scoped, tag = 'output window, operand 0, single buffered']
    %12 = vsyncpa [#allocation4], 0
    %13 = vsyncpa [#allocation7], 0
    %14 = vsyncpa [#allocation5], 0
    // Predicated region
    $region2: #{tpu_custom_call.1} parent=1 // pred_check
      _
    $region3: #{tpu_custom_call.1} parent=1 // pred_check_branch
      %16 = sbr.rel (0) target = $region5
    $region4: #{tpu_custom_call.1} parent=1 // pred_region
      %s18 = ssub.s32 256, 256
      %19 = vsyncadd [#allocation4], %s18
      %s20 = sshll.u32 [#allocation3], 4
      %s21 = int_to_ptr.vmem [resolvable:$true] %s20
      %26 = dma.hbm_to_vmem [thread:$0]  %s0, 256, %s21, [#allocation4], 128, 128, 8
    $region5: #{tpu_custom_call.1} parent=1 // pred_fallthru
      _
    // Predicated region
    $region6: #{tpu_custom_call.1} parent=1 // pred_check
      _
    $region7: #{tpu_custom_call.1} parent=1 // pred_check_branch
      %28 = sbr.rel (0) target = $region9
    $region8: #{tpu_custom_call.1} parent=1 // pred_region
      %s30 = ssub.s32 512, 512
      %31 = vsyncadd [#allocation7], %s30
      %s32 = sshll.u32 [#allocation6], 4
      %s33 = int_to_ptr.vmem [resolvable:$true] %s32
      %38 = dma.hbm_to_vmem [thread:$0]  %s1, 512, %s33, [#allocation7], 128, 128, 8
    $region9: #{tpu_custom_call.1} parent=1 // pred_fallthru
      _
    // Predicated region
    $region10: #{tpu_custom_call.1} parent=1 // pred_check
      _
    $region11: #{tpu_custom_call.1} parent=1 // pred_check_branch
      %40 = sbr.rel (0) target = $region13
    $region12: #{tpu_custom_call.1} parent=1 // pred_region
      _
    $region13: #{tpu_custom_call.1} parent=1 // pred_fallthru
      _
    // Predicated region
    $region14: #{tpu_custom_call.1} parent=1 // pred_check
      _
    $region15: #{tpu_custom_call.1} parent=1 // pred_check_branch
      %42 = sbr.rel (0) target = $region17
    $region16: #{tpu_custom_call.1} parent=1 // pred_region
      _
    $region17: #{tpu_custom_call.1} parent=1 // pred_fallthru
      _
    // Predicated region
    $region18: #{tpu_custom_call.1} parent=1 // pred_check
      _
    $region19: #{tpu_custom_call.1} parent=1 // pred_check_branch
      %44 = sbr.rel (0) target = $region21
    $region20: #{tpu_custom_call.1} parent=1 // pred_region
      _
    $region21: #{tpu_custom_call.1} parent=1 // pred_fallthru
      _
    // Predicated region
    $region22: #{tpu_custom_call.1} parent=1 // pred_check
      _
    $region23: #{tpu_custom_call.1} parent=1 // pred_check_branch
      %46 = sbr.rel (0) target = $region25
    $region24: #{tpu_custom_call.1} parent=1 // pred_region
      %47 = dma.done [#allocation4], 256
    $region25: #{tpu_custom_call.1} parent=1 // pred_fallthru
      _
    // Predicated region
    $region26: #{tpu_custom_call.1} parent=1 // pred_check
      _
    $region27: #{tpu_custom_call.1} parent=1 // pred_check_branch
      %49 = sbr.rel (0) target = $region29
    $region28: #{tpu_custom_call.1} parent=1 // pred_region
      %50 = dma.done [#allocation7], 512
    $region29: #{tpu_custom_call.1} parent=1 // pred_fallthru
      _
    %v51 = vld [vmem:[#allocation3] sm:$0xff]
    %v52 = vld [vmem:[#allocation3 + $0x8] sm:$0xff]
    %v53 = vld [vmem:[#allocation6] sm:$0xff]
    %v54 = vld [vmem:[#allocation6 + $0x8] sm:$0xff]
    %v55 = vld [vmem:[#allocation6 + $0x10] sm:$0xff]
    %v56 = vld [vmem:[#allocation6 + $0x18] sm:$0xff]
    %v57 = vld [vmem:[%s2] sm:$0x1]
    %v59 = vlaneseq
    %v60 = vshrl.u32 %v59, 7
    %v61 = vsub.s32 0, %v60
    %v62 = vrot.slane %v57, %v61
    %vm64 = vcmask 261120
    %v66 = vsel %vm64, %v51, 0
    %v69 = vsel %vm64, %v52, 0
    %71 = vmatprep.subr.mxu0 0.0
    %72 = vmatpush1.msra.mxu0 0.0
    %73 = vmatprep.subr.mxu0 0.0
    %74 = vmatpush1.msra.mxu0 0.0
    %75 = vmatprep.subr.mxu0 0.0
    %76 = vmatpush1.msra.mxu0 0.0
    %77 = vmatprep.subr.mxu0 0.0
    %78 = vmatpush1.msra.mxu0 0.0
    %79 = vmatprep.subr.mxu0 0.0
    %80 = vmatpush1.msra.mxu0 0.0
    %81 = vmatprep.subr.mxu0 0.0
    %82 = vmatpush1.msra.mxu0 0.0
    %83 = vmatprep.subr.mxu0 0.0
    %84 = vmatpush1.msra.mxu0 0.0
    %85 = vmatprep.subr.mxu0 0.0
    %86 = vmatpush1.msra.mxu0 0.0
    %87 = vmatprep.subr.mxu0 0.0
    %88 = vmatpush1.msra.mxu0 0.0
    %89 = vmatprep.subr.mxu0 0.0
    %90 = vmatpush1.msra.mxu0 0.0
    %91 = vmatprep.subr.mxu0 0.0
    %92 = vmatpush1.msra.mxu0 0.0
    %93 = vmatprep.subr.mxu0 0.0
    %94 = vmatpush1.msra.mxu0 0.0
    %95 = vmatprep.subr.mxu0 0.0
    %96 = vmatpush1.msra.mxu0 %v56
    %97 = vmatprep.subr.mxu0 0.0
    %98 = vmatpush1.msra.mxu0 %v55
    %99 = vmatprep.subr.mxu0 0.0
    %100 = vmatpush1.msra.mxu0 %v54
    %101 = vmatprep.subr.mxu0 0.0
    %102 = vmatpush1.msra.mxu0 %v53
    %103 = vmatprep.subr.mxu0 0.0
    %104 = vmatpush2.msra.mxu0 0.0
    %105 = vmatprep.subr.mxu0 0.0
    %106 = vmatpush2.msra.mxu0 0.0
    %107 = vmatprep.subr.mxu0 0.0
    %108 = vmatpush2.msra.mxu0 0.0
    %109 = vmatprep.subr.mxu0 0.0
    %110 = vmatpush2.msra.mxu0 0.0
    %111 = vmatprep.subr.mxu0 0.0
    %112 = vmatpush2.msra.mxu0 0.0
    %113 = vmatprep.subr.mxu0 0.0
    %114 = vmatpush2.msra.mxu0 0.0
    %115 = vmatprep.subr.mxu0 0.0
    %116 = vmatpush2.msra.mxu0 0.0
    %117 = vmatprep.subr.mxu0 0.0
    %118 = vmatpush2.msra.mxu0 0.0
    %119 = vmatprep.subr.mxu0 0.0
    %120 = vmatpush2.msra.mxu0 0.0
    %121 = vmatprep.subr.mxu0 0.0
    %122 = vmatpush2.msra.mxu0 0.0
    %123 = vmatprep.subr.mxu0 0.0
    %124 = vmatpush2.msra.mxu0 0.0
    %125 = vmatprep.subr.mxu0 0.0
    %126 = vmatpush2.msra.mxu0 0.0
    %127 = vmatprep.subr.mxu0 0.0
    %128 = vmatpush2.msra.mxu0 0.0
    %129 = vmatprep.subr.mxu0 0.0
    %130 = vmatpush2.msra.mxu0 0.0
    %131 = vmatprep.subr.mxu0 0.0
    %132 = vmatpush2.msra.mxu0 0.0
    %133 = vmatprep.subr.mxu0 0.0
    %134 = vmatpush2.msra.mxu0 0.0
    %135 = vmatprep.mubr.f32.mxu0 0.0
    %136 = vmatmul.mubr.f32.gmra.mxu0 %v66
    %v137 = vpop.f32.mrf.mxu0
    %v138 = vadd.f32 %v62, %v137
    %v139 = vpop.f32.mrf.mxu0
    %140 = vmatprep.mubr.f32.mxu0 0.0
    %141 = vmatmul.mubr.f32.gmra.mxu0 %v69
    %v142 = vpop.f32.mrf.mxu0
    %v143 = vadd.f32 %v62, %v142
    %v144 = vpop.f32.mrf.mxu0
    %145 = vdwg.mxu0
    %147 = vrot.lane.b32.xlu0 %v138, 112
    %v148 = vpop.permute.xlu0 %147
    %vm149 = vcmask 130048
    %v150 = vsel %vm149, %v138, 0
    %v152 = vsel %vm149, %v148, 0
    %154 = vmatprep.subr.mxu0 0.0
    %155 = vmatpush1.xpose.msra.mxu0 0.0
    %156 = vmatprep.subr.mxu0 0.0
    %157 = vmatpush1.xpose.msra.mxu0 0.0
    %158 = vmatprep.subr.mxu0 0.0
    %159 = vmatpush1.xpose.msra.mxu0 0.0
    %160 = vmatprep.subr.mxu0 0.0
    %161 = vmatpush1.xpose.msra.mxu0 0.0
    %162 = vmatprep.subr.mxu0 0.0
    %163 = vmatpush1.xpose.msra.mxu0 0.0
    %164 = vmatprep.subr.mxu0 0.0
    %165 = vmatpush1.xpose.msra.mxu0 0.0
    %166 = vmatprep.subr.mxu0 0.0
    %167 = vmatpush1.xpose.msra.mxu0 0.0
    %168 = vmatprep.subr.mxu0 0.0
    %169 = vmatpush1.xpose.msra.mxu0 0.0
    %170 = vmatprep.subr.mxu0 0.0
    %171 = vmatpush1.xpose.msra.mxu0 0.0
    %172 = vmatprep.subr.mxu0 0.0
    %173 = vmatpush1.xpose.msra.mxu0 0.0
    %174 = vmatprep.subr.mxu0 0.0
    %175 = vmatpush1.xpose.msra.mxu0 0.0
    %176 = vmatprep.subr.mxu0 0.0
    %177 = vmatpush1.xpose.msra.mxu0 0.0
    %178 = vmatprep.subr.mxu0 0.0
    %179 = vmatpush1.xpose.msra.mxu0 0.0
    %180 = vmatprep.subr.mxu0 0.0
    %181 = vmatpush1.xpose.msra.mxu0 0.0
    %182 = vmatprep.subr.mxu0 0.0
    %183 = vmatpush1.xpose.msra.mxu0 0.0
    %184 = vmatprep.subr.mxu0 0.0
    %185 = vmatpush1.xpose.msra.mxu0 %v152
    %186 = vmatprep.subr.mxu0 0.0
    %187 = vmatpush2.xpose.msra.mxu0 0.0
    %188 = vmatprep.subr.mxu0 0.0
    %189 = vmatpush2.xpose.msra.mxu0 0.0
    %190 = vmatprep.subr.mxu0 0.0
    %191 = vmatpush2.xpose.msra.mxu0 0.0
    %192 = vmatprep.subr.mxu0 0.0
    %193 = vmatpush2.xpose.msra.mxu0 0.0
    %194 = vmatprep.subr.mxu0 0.0
    %195 = vmatpush2.xpose.msra.mxu0 0.0
    %196 = vmatprep.subr.mxu0 0.0
    %197 = vmatpush2.xpose.msra.mxu0 0.0
    %198 = vmatprep.subr.mxu0 0.0
    %199 = vmatpush2.xpose.msra.mxu0 0.0
    %200 = vmatprep.subr.mxu0 0.0
    %201 = vmatpush2.xpose.msra.mxu0 0.0
    %202 = vmatprep.subr.mxu0 0.0
    %203 = vmatpush2.xpose.msra.mxu0 0.0
    %204 = vmatprep.subr.mxu0 0.0
    %205 = vmatpush2.xpose.msra.mxu0 0.0
    %206 = vmatprep.subr.mxu0 0.0
    %207 = vmatpush2.xpose.msra.mxu0 0.0
    %208 = vmatprep.subr.mxu0 0.0
    %209 = vmatpush2.xpose.msra.mxu0 0.0
    %210 = vmatprep.subr.mxu0 0.0
    %211 = vmatpush2.xpose.msra.mxu0 0.0
    %212 = vmatprep.subr.mxu0 0.0
    %213 = vmatpush2.xpose.msra.mxu0 0.0
    %214 = vmatprep.subr.mxu0 0.0
    %215 = vmatpush2.xpose.msra.mxu0 0.0
    %216 = vmatprep.subr.mxu0 0.0
    %217 = vmatpush2.xpose.msra.mxu0 0.0
    %218 = vmatprep.mubr.f32.mxu0 0.0
    %219 = vmatmul.mubr.f32.gmra.mxu0 %v150
    %v220 = vpop.f32.mrf.mxu0
    %v221 = vadd.f32 0.0, %v220
    %v222 = vpop.f32.mrf.mxu0
    %223 = vdwg.mxu0
    %225 = vrot.lane.b32.xlu0 %v143, 112
    %v226 = vpop.permute.xlu0 %225
    %v227 = vsel %vm149, %v143, 0
    %v229 = vsel %vm149, %v226, 0
    %231 = vmatprep.subr.mxu0 0.0
    %232 = vmatpush1.xpose.msra.mxu0 0.0
    %233 = vmatprep.subr.mxu0 0.0
    %234 = vmatpush1.xpose.msra.mxu0 0.0
    %235 = vmatprep.subr.mxu0 0.0
    %236 = vmatpush1.xpose.msra.mxu0 0.0
    %237 = vmatprep.subr.mxu0 0.0
    %238 = vmatpush1.xpose.msra.mxu0 0.0
    %239 = vmatprep.subr.mxu0 0.0
    %240 = vmatpush1.xpose.msra.mxu0 0.0
    %241 = vmatprep.subr.mxu0 0.0
    %242 = vmatpush1.xpose.msra.mxu0 0.0
    %243 = vmatprep.subr.mxu0 0.0
    %244 = vmatpush1.xpose.msra.mxu0 0.0
    %245 = vmatprep.subr.mxu0 0.0
    %246 = vmatpush1.xpose.msra.mxu0 0.0
    %247 = vmatprep.subr.mxu0 0.0
    %248 = vmatpush1.xpose.msra.mxu0 0.0
    %249 = vmatprep.subr.mxu0 0.0
    %250 = vmatpush1.xpose.msra.mxu0 0.0
    %251 = vmatprep.subr.mxu0 0.0
    %252 = vmatpush1.xpose.msra.mxu0 0.0
    %253 = vmatprep.subr.mxu0 0.0
    %254 = vmatpush1.xpose.msra.mxu0 0.0
    %255 = vmatprep.subr.mxu0 0.0
    %256 = vmatpush1.xpose.msra.mxu0 0.0
    %257 = vmatprep.subr.mxu0 0.0
    %258 = vmatpush1.xpose.msra.mxu0 0.0
    %259 = vmatprep.subr.mxu0 0.0
    %260 = vmatpush1.xpose.msra.mxu0 0.0
    %261 = vmatprep.subr.mxu0 0.0
    %262 = vmatpush1.xpose.msra.mxu0 %v229
    %263 = vmatprep.subr.mxu0 0.0
    %264 = vmatpush2.xpose.msra.mxu0 0.0
    %265 = vmatprep.subr.mxu0 0.0
    %266 = vmatpush2.xpose.msra.mxu0 0.0
    %267 = vmatprep.subr.mxu0 0.0
    %268 = vmatpush2.xpose.msra.mxu0 0.0
    %269 = vmatprep.subr.mxu0 0.0
    %270 = vmatpush2.xpose.msra.mxu0 0.0
    %271 = vmatprep.subr.mxu0 0.0
    %272 = vmatpush2.xpose.msra.mxu0 0.0
    %273 = vmatprep.subr.mxu0 0.0
    %274 = vmatpush2.xpose.msra.mxu0 0.0
    %275 = vmatprep.subr.mxu0 0.0
    %276 = vmatpush2.xpose.msra.mxu0 0.0
    %277 = vmatprep.subr.mxu0 0.0
    %278 = vmatpush2.xpose.msra.mxu0 0.0
    %279 = vmatprep.subr.mxu0 0.0
    %280 = vmatpush2.xpose.msra.mxu0 0.0
    %281 = vmatprep.subr.mxu0 0.0
    %282 = vmatpush2.xpose.msra.mxu0 0.0
    %283 = vmatprep.subr.mxu0 0.0
    %284 = vmatpush2.xpose.msra.mxu0 0.0
    %285 = vmatprep.subr.mxu0 0.0
    %286 = vmatpush2.xpose.msra.mxu0 0.0
    %287 = vmatprep.subr.mxu0 0.0
    %288 = vmatpush2.xpose.msra.mxu0 0.0
    %289 = vmatprep.subr.mxu0 0.0
    %290 = vmatpush2.xpose.msra.mxu0 0.0
    %291 = vmatprep.subr.mxu0 0.0
    %292 = vmatpush2.xpose.msra.mxu0 0.0
    %293 = vmatprep.subr.mxu0 0.0
    %294 = vmatpush2.xpose.msra.mxu0 0.0
    %295 = vmatprep.mubr.f32.mxu0 0.0
    %296 = vmatmul.mubr.f32.gmra.mxu0 %v227
    %v297 = vpop.f32.mrf.mxu0
    %v298 = vadd.f32 0.0, %v297
    %v299 = vpop.f32.mrf.mxu0
    %300 = vdwg.mxu0
    %vm301 = vcmask 64512
    %v302 = vsel %vm301, %v221, -inf
    %303 = vmax.xlane.f32.xlu0 %v302
    %v304 = vpop.xlane.xlu0 %303
    %v305 = vsel %vm301, %v298, -inf
    %306 = vmax.xlane.f32.xlu0 %v305
    %v307 = vpop.xlane.xlu0 %306
    %v308 = vsub.f32 %v221, %v304
    %v309 = vsub.f32 %v298, %v307
    %v310 = vmul.f32 %v308, 1.442695
    %v311 = vpow.pop %v310
    %v312 = vmul.f32 %v309, 1.442695
    %v313 = vpow.pop %v312
    %v314 = vsel %vm301, %v311, 0.0
    %315 = vadd.xlane.f32.xlu0 %v314
    %v316 = vpop.xlane.xlu0 %315
    %v317 = vsel %vm301, %v313, 0.0
    %318 = vadd.xlane.f32.xlu0 %v317
    %v319 = vpop.xlane.xlu0 %318
    %v320 = vld [vmem:[%s3] sm:$0x1]
    %v322 = vlaneseq
    %v323 = vshrl.u32 %v322, 7
    %v324 = vsub.s32 0, %v323
    %v325 = vrot.slane %v320, %v324
    %v327 = vmul.f32 %v311, %v325
    %v328 = vmul.f32 %v313, %v325
    %v329 = vsel %vm301, %v327, 0.0
    %330 = vadd.xlane.f32.xlu0 %v329
    %v331 = vpop.xlane.xlu0 %330
    %v332 = vsel %vm301, %v328, 0.0
    %333 = vadd.xlane.f32.xlu0 %v332
    %v334 = vpop.xlane.xlu0 %333
    %v335 = vrcp.pop %v316
    %v336 = vmul.f32 %v331, %v335
    %v337 = vrcp.pop %v319
    %v338 = vmul.f32 %v334, %v337
    %v339 = vld [vmem:[#allocation2] sm:$0x1]
    %v341 = vlaneseq
    %v342 = vshrl.u32 %v341, 7
    %v343 = vsub.s32 0, %v342
    %v344 = vrot.slane %v339, %v343
    %v346 = vadd.f32 %v336, %v344
    %v347 = vadd.f32 %v338, %v344
    %vm348 = vcmask 7168
    %v349 = vsel %vm348, %v346, -inf
    %v350 = vrot.slane %v349, 4
    %v351 = vmax.f32 %v349, %v350
    %v352 = vrot.slane %v351, 2
    %v353 = vmax.f32 %v351, %v352
    %v354 = vrot.slane %v353, 1
    %v355 = vmax.f32 %v353, %v354
    %v356 = vsel %vm348, %v347, -inf
    %v357 = vrot.slane %v356, 4
    %v358 = vmax.f32 %v356, %v357
    %v359 = vrot.slane %v358, 2
    %v360 = vmax.f32 %v358, %v359
    %v361 = vrot.slane %v360, 1
    %v362 = vmax.f32 %v360, %v361
    %v363 = vsub.f32 %v346, %v355
    %v364 = vsub.f32 %v347, %v362
    %v365 = vmul.f32 %v363, 1.442695
    %v366 = vpow.pop %v365
    %v367 = vmul.f32 %v364, 1.442695
    %v368 = vpow.pop %v367
    %v369 = vsel %vm348, %v366, 0.0
    %v370 = vrot.slane %v369, 4
    %v371 = vadd.f32 %v369, %v370
    %v372 = vrot.slane %v371, 2
    %v373 = vadd.f32 %v371, %v372
    %v374 = vrot.slane %v373, 1
    %v375 = vadd.f32 %v373, %v374
    %v376 = vsel %vm348, %v368, 0.0
    %v377 = vrot.slane %v376, 4
    %v378 = vadd.f32 %v376, %v377
    %v379 = vrot.slane %v378, 2
    %v380 = vadd.f32 %v378, %v379
    %v381 = vrot.slane %v380, 1
    %v382 = vadd.f32 %v380, %v381
    %v383 = vrcp.pop %v375
    %v384 = vmul.f32 %v366, %v383
    %v385 = vrcp.pop %v382
    %v386 = vmul.f32 %v368, %v385
    %387 = vxpose.xlu0.b32.start [1/16] %v384, 128
    %388 = vxpose.xlu0.b32.cont [2/16] 0.0, 128
    %389 = vxpose.xlu0.b32.cont [3/16] 0.0, 128
    %390 = vxpose.xlu0.b32.cont [4/16] 0.0, 128
    %391 = vxpose.xlu0.b32.cont [5/16] 0.0, 128
    %392 = vxpose.xlu0.b32.cont [6/16] 0.0, 128
    %393 = vxpose.xlu0.b32.cont [7/16] 0.0, 128
    %394 = vxpose.xlu0.b32.cont [8/16] 0.0, 128
    %395 = vxpose.xlu0.b32.cont [9/16] 0.0, 128
    %396 = vxpose.xlu0.b32.cont [10/16] 0.0, 128
    %397 = vxpose.xlu0.b32.cont [11/16] 0.0, 128
    %398 = vxpose.xlu0.b32.cont [12/16] 0.0, 128
    %399 = vxpose.xlu0.b32.cont [13/16] 0.0, 128
    %400 = vxpose.xlu0.b32.cont [14/16] 0.0, 128
    %401 = vxpose.xlu0.b32.cont [15/16] 0.0, 128
    %402 = vxpose.xlu0.b32.end [16/16] 0.0, 128
    %v403 = vpop.trf.xlu0
    %v404 = vpop.trf.xlu0
    %v405 = vpop.trf.xlu0
    %v406 = vpop.trf.xlu0
    %v407 = vpop.trf.xlu0
    %v408 = vpop.trf.xlu0
    %v409 = vpop.trf.xlu0
    %v410 = vpop.trf.xlu0
    %v411 = vpop.trf.xlu0
    %v412 = vpop.trf.xlu0
    %v413 = vpop.trf.xlu0
    %v414 = vpop.trf.xlu0
    %v415 = vpop.trf.xlu0
    %v416 = vpop.trf.xlu0
    %v417 = vpop.trf.xlu0
    %v418 = vpop.trf.xlu0
    %v420 = vsel %vm301, %v403, 0
    %422 = vmatprep.subr.mxu0 0.0
    %423 = vmatpush1.msra.mxu0 0.0
    %424 = vmatprep.subr.mxu0 0.0
    %425 = vmatpush1.msra.mxu0 0.0
    %426 = vmatprep.subr.mxu0 0.0
    %427 = vmatpush1.msra.mxu0 0.0
    %428 = vmatprep.subr.mxu0 0.0
    %429 = vmatpush1.msra.mxu0 0.0
    %430 = vmatprep.subr.mxu0 0.0
    %431 = vmatpush1.msra.mxu0 0.0
    %432 = vmatprep.subr.mxu0 0.0
    %433 = vmatpush1.msra.mxu0 0.0
    %434 = vmatprep.subr.mxu0 0.0
    %435 = vmatpush1.msra.mxu0 0.0
    %436 = vmatprep.subr.mxu0 0.0
    %437 = vmatpush1.msra.mxu0 0.0
    %438 = vmatprep.subr.mxu0 0.0
    %439 = vmatpush1.msra.mxu0 0.0
    %440 = vmatprep.subr.mxu0 0.0
    %441 = vmatpush1.msra.mxu0 0.0
    %442 = vmatprep.subr.mxu0 0.0
    %443 = vmatpush1.msra.mxu0 0.0
    %444 = vmatprep.subr.mxu0 0.0
    %445 = vmatpush1.msra.mxu0 0.0
    %446 = vmatprep.subr.mxu0 0.0
    %447 = vmatpush1.msra.mxu0 0.0
    %448 = vmatprep.subr.mxu0 0.0
    %449 = vmatpush1.msra.mxu0 0.0
    %450 = vmatprep.subr.mxu0 0.0
    %451 = vmatpush1.msra.mxu0 0.0
    %452 = vmatprep.subr.mxu0 0.0
    %453 = vmatpush1.msra.mxu0 %v51
    %454 = vmatprep.subr.mxu0 0.0
    %455 = vmatpush2.msra.mxu0 0.0
    %456 = vmatprep.subr.mxu0 0.0
    %457 = vmatpush2.msra.mxu0 0.0
    %458 = vmatprep.subr.mxu0 0.0
    %459 = vmatpush2.msra.mxu0 0.0
    %460 = vmatprep.subr.mxu0 0.0
    %461 = vmatpush2.msra.mxu0 0.0
    %462 = vmatprep.subr.mxu0 0.0
    %463 = vmatpush2.msra.mxu0 0.0
    %464 = vmatprep.subr.mxu0 0.0
    %465 = vmatpush2.msra.mxu0 0.0
    %466 = vmatprep.subr.mxu0 0.0
    %467 = vmatpush2.msra.mxu0 0.0
    %468 = vmatprep.subr.mxu0 0.0
    %469 = vmatpush2.msra.mxu0 0.0
    %470 = vmatprep.subr.mxu0 0.0
    %471 = vmatpush2.msra.mxu0 0.0
    %472 = vmatprep.subr.mxu0 0.0
    %473 = vmatpush2.msra.mxu0 0.0
    %474 = vmatprep.subr.mxu0 0.0
    %475 = vmatpush2.msra.mxu0 0.0
    %476 = vmatprep.subr.mxu0 0.0
    %477 = vmatpush2.msra.mxu0 0.0
    %478 = vmatprep.subr.mxu0 0.0
    %479 = vmatpush2.msra.mxu0 0.0
    %480 = vmatprep.subr.mxu0 0.0
    %481 = vmatpush2.msra.mxu0 0.0
    %482 = vmatprep.subr.mxu0 0.0
    %483 = vmatpush2.msra.mxu0 0.0
    %484 = vmatprep.subr.mxu0 0.0
    %485 = vmatpush2.msra.mxu0 0.0
    %486 = vmatprep.mubr.f32.mxu0 0.0
    %487 = vmatmul.mubr.f32.gmra.mxu0 %v420
    %v488 = vpop.f32.mrf.mxu0
    %v489 = vadd.f32 0.0, %v488
    %v490 = vpop.f32.mrf.mxu0
    %491 = vdwg.mxu0
    %492 = vxpose.xlu0.b32.start [1/16] %v386, 128
    %493 = vxpose.xlu0.b32.cont [2/16] 0.0, 128
    %494 = vxpose.xlu0.b32.cont [3/16] 0.0, 128
    %495 = vxpose.xlu0.b32.cont [4/16] 0.0, 128
    %496 = vxpose.xlu0.b32.cont [5/16] 0.0, 128
    %497 = vxpose.xlu0.b32.cont [6/16] 0.0, 128
    %498 = vxpose.xlu0.b32.cont [7/16] 0.0, 128
    %499 = vxpose.xlu0.b32.cont [8/16] 0.0, 128
    %500 = vxpose.xlu0.b32.cont [9/16] 0.0, 128
    %501 = vxpose.xlu0.b32.cont [10/16] 0.0, 128
    %502 = vxpose.xlu0.b32.cont [11/16] 0.0, 128
    %503 = vxpose.xlu0.b32.cont [12/16] 0.0, 128
    %504 = vxpose.xlu0.b32.cont [13/16] 0.0, 128
    %505 = vxpose.xlu0.b32.cont [14/16] 0.0, 128
    %506 = vxpose.xlu0.b32.cont [15/16] 0.0, 128
    %507 = vxpose.xlu0.b32.end [16/16] 0.0, 128
    %v508 = vpop.trf.xlu0
    %v509 = vpop.trf.xlu0
    %v510 = vpop.trf.xlu0
    %v511 = vpop.trf.xlu0
    %v512 = vpop.trf.xlu0
    %v513 = vpop.trf.xlu0
    %v514 = vpop.trf.xlu0
    %v515 = vpop.trf.xlu0
    %v516 = vpop.trf.xlu0
    %v517 = vpop.trf.xlu0
    %v518 = vpop.trf.xlu0
    %v519 = vpop.trf.xlu0
    %v520 = vpop.trf.xlu0
    %v521 = vpop.trf.xlu0
    %v522 = vpop.trf.xlu0
    %v523 = vpop.trf.xlu0
    %v525 = vsel %vm301, %v508, 0
    %527 = vmatprep.subr.mxu0 0.0
    %528 = vmatpush1.msra.mxu0 0.0
    %529 = vmatprep.subr.mxu0 0.0
    %530 = vmatpush1.msra.mxu0 0.0
    %531 = vmatprep.subr.mxu0 0.0
    %532 = vmatpush1.msra.mxu0 0.0
    %533 = vmatprep.subr.mxu0 0.0
    %534 = vmatpush1.msra.mxu0 0.0
    %535 = vmatprep.subr.mxu0 0.0
    %536 = vmatpush1.msra.mxu0 0.0
    %537 = vmatprep.subr.mxu0 0.0
    %538 = vmatpush1.msra.mxu0 0.0
    %539 = vmatprep.subr.mxu0 0.0
    %540 = vmatpush1.msra.mxu0 0.0
    %541 = vmatprep.subr.mxu0 0.0
    %542 = vmatpush1.msra.mxu0 0.0
    %543 = vmatprep.subr.mxu0 0.0
    %544 = vmatpush1.msra.mxu0 0.0
    %545 = vmatprep.subr.mxu0 0.0
    %546 = vmatpush1.msra.mxu0 0.0
    %547 = vmatprep.subr.mxu0 0.0
    %548 = vmatpush1.msra.mxu0 0.0
    %549 = vmatprep.subr.mxu0 0.0
    %550 = vmatpush1.msra.mxu0 0.0
    %551 = vmatprep.subr.mxu0 0.0
    %552 = vmatpush1.msra.mxu0 0.0
    %553 = vmatprep.subr.mxu0 0.0
    %554 = vmatpush1.msra.mxu0 0.0
    %555 = vmatprep.subr.mxu0 0.0
    %556 = vmatpush1.msra.mxu0 0.0
    %557 = vmatprep.subr.mxu0 0.0
    %558 = vmatpush1.msra.mxu0 %v52
    %559 = vmatprep.subr.mxu0 0.0
    %560 = vmatpush2.msra.mxu0 0.0
    %561 = vmatprep.subr.mxu0 0.0
    %562 = vmatpush2.msra.mxu0 0.0
    %563 = vmatprep.subr.mxu0 0.0
    %564 = vmatpush2.msra.mxu0 0.0
    %565 = vmatprep.subr.mxu0 0.0
    %566 = vmatpush2.msra.mxu0 0.0
    %567 = vmatprep.subr.mxu0 0.0
    %568 = vmatpush2.msra.mxu0 0.0
    %569 = vmatprep.subr.mxu0 0.0
    %570 = vmatpush2.msra.mxu0 0.0
    %571 = vmatprep.subr.mxu0 0.0
    %572 = vmatpush2.msra.mxu0 0.0
    %573 = vmatprep.subr.mxu0 0.0
    %574 = vmatpush2.msra.mxu0 0.0
    %575 = vmatprep.subr.mxu0 0.0
    %576 = vmatpush2.msra.mxu0 0.0
    %577 = vmatprep.subr.mxu0 0.0
    %578 = vmatpush2.msra.mxu0 0.0
    %579 = vmatprep.subr.mxu0 0.0
    %580 = vmatpush2.msra.mxu0 0.0
    %581 = vmatprep.subr.mxu0 0.0
    %582 = vmatpush2.msra.mxu0 0.0
    %583 = vmatprep.subr.mxu0 0.0
    %584 = vmatpush2.msra.mxu0 0.0
    %585 = vmatprep.subr.mxu0 0.0
    %586 = vmatpush2.msra.mxu0 0.0
    %587 = vmatprep.subr.mxu0 0.0
    %588 = vmatpush2.msra.mxu0 0.0
    %589 = vmatprep.subr.mxu0 0.0
    %590 = vmatpush2.msra.mxu0 0.0
    %591 = vmatprep.mubr.f32.mxu0 0.0
    %592 = vmatmul.mubr.f32.gmra.mxu0 %v525
    %v593 = vpop.f32.mrf.mxu0
    %v594 = vadd.f32 0.0, %v593
    %v595 = vpop.f32.mrf.mxu0
    %596 = vdwg.mxu0
    %v599 = vrot.slane %v594, 7
    %vm600 = vcmask 1041409
    %v601 = vsel %vm600, %v599, %v489
    %vm603 = vcmask 254976
    %604 = vst.msk [vmem:[#allocation8] sm:$0x3] %vm603, %v601
    // Predicated region
    $region30: #{tpu_custom_call.1} parent=1 // pred_check
      _
    $region31: #{tpu_custom_call.1} parent=1 // pred_check_branch
      %606 = sbr.rel (0) target = $region33
    $region32: #{tpu_custom_call.1} parent=1 // pred_region
      %s608 = ssub.s32 32, 32
      %609 = vsyncadd [#allocation5], %s608
      %s611 = sshll.u32 [#allocation8], 4
      %s612 = int_to_ptr.vmem [resolvable:$true] %s611
      %614 = dma.vmem_to_hbm [thread:$0]  %s612, 32, %s5, [#allocation5]
    $region33: #{tpu_custom_call.1} parent=1 // pred_fallthru
      _
    // Predicated region
    $region34: #{tpu_custom_call.1} parent=1 // pred_check
      _
    $region35: #{tpu_custom_call.1} parent=1 // pred_check_branch
      %616 = sbr.rel (0) target = $region37
    $region36: #{tpu_custom_call.1} parent=1 // pred_region
      %617 = dma.done [#allocation5], 32
    $region37: #{tpu_custom_call.1} parent=1 // pred_fallthru
      _
    %618 = vsyncpa [#allocation4], 1
    %619 = vsyncpa [#allocation7], 1
    %620 = vsyncpa [#allocation5], 1

</llo_original>
